<compile_context>
chip_gen: v5e
topology: v5e:2x2
jax: 0.10.0
libtpu: 0.0.40
codegen_flags: <defaults>
</compile_context>

<pallas_src>
import jax
import jax.numpy as jnp
from jax.experimental import pallas as pl
from jax.experimental.pallas import tpu as pltpu


def predict_loss_kernel(x_ref, o_ref):
    """One grid step: a (b_tile, N, D) slab of batches -> (b_tile, N) losses.

    Relies on ||xn_j||^2 == 1 exactly (diagonal removal); fine with the
    full-precision rsqrt (~1e-7 error).  Do NOT swap in an approximate
    reciprocal/rsqrt for the normalization.
    No epsilon on the norm, matching torch: an all-zero row yields NaN, and the
    NaN stays confined to its own batch (reduction is per-batch).
    """
    x = x_ref[...].astype(jnp.float32)                          # (Bt, N, D)
    n = x.shape[1]
    # Row rsqrt-norm runs on the EUP slot (free vs. VALU sqrt+divide).
    r = jax.lax.rsqrt(jnp.sum(x * x, axis=-1, keepdims=True))   # (Bt, N, 1)
    # s = sum_i xn_i; xn (= x * r) is only live inside this sublane reduction.
    s = jnp.sum(x * r, axis=1, keepdims=True)                   # (Bt, 1, D)
    # dot_j = xn_j . s == r_j * (x_j . s): reuses x, never re-materializes xn.
    d = jnp.sum(x * s, axis=-1, keepdims=True) * r              # (Bt, N, 1)
    # TODO(synk): output lane dim is N (<128 in the test) -> masked stores; a
    # lane-dense flattened output slab would avoid that but the output is tiny
    # relative to the streamed input, so it is not worth the reshape.
    o_ref[...] = ((d[:, :, 0] - 1.0) * (1.0 / (n - 1))).astype(o_ref.dtype)


def predict_loss(sensor, b_tile=None, tile_target_bytes=6 << 20):
    """Pallas TPU implementation of PredictLoss.forward.

    sensor: (B, N, D) float array (f32 or bf16; accumulation is f32 in-kernel).
    Returns (B, N) float32.
    """
    B, N, D = sensor.shape
    itemsize = jnp.dtype(sensor.dtype).itemsize
    per_batch_bytes = N * D * itemsize
    total_bytes = B * per_batch_bytes

    def vmem_estimate(bt):
        # VMEM tiles pad the (sublane, lane) dims to (8, 128); with D < 128 the
        # footprint inflates accordingly, so size tiles off the padded shape.
        n_pad = -(-N // 8) * 8
        d_pad = -(-D // 128) * 128
        in_tile = bt * n_pad * d_pad * itemsize
        f32_tile = bt * n_pad * d_pad * 4
        # 2x input (double-buffered) + ~2x f32 intermediates + slack.
        return 2 * in_tile + 2 * f32_tile + (2 << 20)

    vmem_budget = 40 << 20  # headroom under v7x's 64 MiB physical VMEM

    if b_tile is None:
        if B <= 8 or total_bytes <= tile_target_bytes:
            # Small problem: a single grid step covering the whole batch.  The
            # block equals the full batch dim (so no sublane-alignment issue),
            # and we skip the megacore split / per-step overhead for tiny data.
            b_tile = B
        else:
            # Sublane-aligned (multiple of 8) tile near the byte target so the
            # output block's sublane dim never needs masked stores.
            b_tile = max(8, (int(tile_target_bytes // per_batch_bytes) // 8) * 8)
            # Prefer >= 4 grid steps when data is plentiful so each v7x
            # TensorCore gets >= 2 steps and can pipeline its DMAs (harmless on
            # single-TC v5e/v6e: the tile is still well above per-step overhead).
            while b_tile > 8 and pl.cdiv(B, b_tile) < 4:
                b_tile = max(8, ((b_tile // 2) // 8) * 8)

    # Sanitize explicit / heuristic b_tile: must be a multiple of 8 or == B.
    b_tile = int(b_tile)
    if b_tile >= B:
        b_tile = B
    elif b_tile % 8 != 0:
        b_tile = max(8, (b_tile // 8) * 8)
        if b_tile >= B:
            b_tile = B

    # Shrink while the (padded) VMEM estimate does not fit comfortably.  Only
    # possible down to 8 (or B when B <= 8); beyond that we just raise the limit.
    while b_tile > 8 and vmem_estimate(b_tile) > vmem_budget:
        b_tile = max(8, ((b_tile // 2) // 8) * 8)

    num_steps = pl.cdiv(B, b_tile)
    vmem_limit_bytes = int(min(max(3 * vmem_estimate(b_tile) // 2, 32 << 20), 56 << 20))

    # No padding / extra HBM copy of `sensor`: when B % b_tile != 0 the final
    # grid step is a partial block.  Pallas clamps both the input and output
    # DMAs to the array bounds; the out-of-range sublanes of the input VMEM
    # block hold garbage, but every output row depends only on its own batch
    # row, and the garbage rows are never written back.
    # NOTE: this relies on per-batch independence -- reinstate padding before
    # adding any cross-batch reduction to the kernel.
    #
    # TODO(synk): when D < 128 the lane dim of each block is only partially
    # occupied (4x VMEM inflation at D=32).  A lane-dense variant would flatten
    # (N, D) -> N*D in the wrapper and re-segment in-kernel, but that needs a
    # lane->sublane relayout whose Mosaic support is shape-dependent; HBM reads
    # stay fully contiguous either way (N and D are untiled), so it is skipped.
    out = pl.pallas_call(
        predict_loss_kernel,
        out_shape=jax.ShapeDtypeStruct((B, N), jnp.float32),
        grid=(num_steps,),
        in_specs=[pl.BlockSpec((b_tile, N, D), lambda i: (i, 0, 0))],
        out_specs=pl.BlockSpec((b_tile, N), lambda i: (i, 0)),
        compiler_params=pltpu.CompilerParams(
            dimension_semantics=("parallel",),
            vmem_limit_bytes=vmem_limit_bytes,
        ),
    )(sensor)
    return out


def predict_loss_ref(sensor):
    # Pure-JAX reference replicating the PyTorch module.
    x = sensor / jnp.linalg.norm(sensor, axis=2, keepdims=True)
    sim = jnp.einsum("bnd,bmd->bnm", x, x)
    n = sim.shape[1]
    eye = jnp.eye(n, dtype=bool)
    sim = jnp.where(eye[None, :, :], 0.0, sim)
    return jnp.mean(sim, axis=1) * n / (n - 1)


if __name__ == "__main__":
    key = jax.random.PRNGKey(0)
    B, N, D = 2, 8, 32
    sensor = jax.random.normal(key, (B, N, D), dtype=jnp.float32)

    out = jax.block_until_ready(predict_loss(sensor))
    ref = predict_loss_ref(sensor)
    assert out.shape == (B, N)
    assert jnp.allclose(out, ref, atol=1e-5, rtol=1e-5), "mismatch vs reference"

    # Also exercise the multi-step grid with a partial final block (no padding).
    B2 = 20
    sensor2 = jax.random.normal(jax.random.PRNGKey(1), (B2, N, D), dtype=jnp.float32)
    out2 = jax.block_until_ready(predict_loss(sensor2, b_tile=8))
    ref2 = predict_loss_ref(sensor2)
    assert out2.shape == (B2, N)
    assert jnp.allclose(out2, ref2, atol=1e-5, rtol=1e-5), "edge-block mismatch"

    print("KERNEL_OK")
</pallas_src>

<mosaic_0001>
module attributes {stable_mosaic.version = 11 : i64} {
  func.func @predict_loss_kernel(%arg0: i32, %arg1: memref<2x8x32xf32, #tpu.memory_space<vmem>>, %arg2: memref<2x8xf32, #tpu.memory_space<vmem>>) attributes {dimension_semantics = [#tpu.dimension_semantics<parallel>], iteration_bounds = array<i64: 1>, scalar_prefetch = 0 : i64, scratch_operands = 0 : i64, tpu.core_type = #tpu.core_type<tc>, window_params = [{transform_indices = @transform_0, window_bounds = array<i64: 2, 8, 32>}, {transform_indices = @transform_1, window_bounds = array<i64: 2, 8>}]} {
    %c0 = arith.constant 0 : index
    %c0_0 = arith.constant 0 : index
    %c0_1 = arith.constant 0 : index
    %0 = vector.load %arg1[%c0, %c0_0, %c0_1] : memref<2x8x32xf32, #tpu.memory_space<vmem>>, vector<2x8x32xf32>
    %1 = arith.mulf %0, %0 : vector<2x8x32xf32>
    %cst = arith.constant dense<0.000000e+00> : vector<2x8xf32>
    %2 = vector.multi_reduction <add>, %1, %cst [2] : vector<2x8x32xf32> to vector<2x8xf32>
    %3 = vector.shape_cast %2 : vector<2x8xf32> to vector<2x8x1xf32>
    %4 = math.rsqrt %3 : vector<2x8x1xf32>
    %5 = vector.broadcast %4 : vector<2x8x1xf32> to vector<2x8x32xf32>
    %6 = arith.mulf %0, %5 : vector<2x8x32xf32>
    %cst_2 = arith.constant dense<0.000000e+00> : vector<2x32xf32>
    %7 = vector.multi_reduction <add>, %6, %cst_2 [1] : vector<2x8x32xf32> to vector<2x32xf32>
    %8 = vector.shape_cast %7 : vector<2x32xf32> to vector<2x1x32xf32>
    %9 = vector.broadcast %8 : vector<2x1x32xf32> to vector<2x8x32xf32>
    %10 = arith.mulf %0, %9 : vector<2x8x32xf32>
    %cst_3 = arith.constant dense<0.000000e+00> : vector<2x8xf32>
    %11 = vector.multi_reduction <add>, %10, %cst_3 [2] : vector<2x8x32xf32> to vector<2x8xf32>
    %12 = vector.shape_cast %11 : vector<2x8xf32> to vector<2x8x1xf32>
    %13 = arith.mulf %12, %4 : vector<2x8x1xf32>
    %14 = vector.shape_cast %13 : vector<2x8x1xf32> to vector<2x8xf32>
    %cst_4 = arith.constant 1.000000e+00 : f32
    %15 = vector.broadcast %cst_4 : f32 to vector<2x8xf32>
    %16 = arith.subf %14, %15 : vector<2x8xf32>
    %cst_5 = arith.constant 0.142857149 : f32
    %17 = vector.broadcast %cst_5 : f32 to vector<2x8xf32>
    %18 = arith.mulf %16, %17 : vector<2x8xf32>
    %c0_6 = arith.constant 0 : index
    %c0_7 = arith.constant 0 : index
    %19 = vector.load %arg2[%c0_6, %c0_7] : memref<2x8xf32, #tpu.memory_space<vmem>>, vector<2x8xf32>
    tpu.vector_store %arg2[%c0_6, %c0_7], %18 {strides = array<i32>} : memref<2x8xf32, #tpu.memory_space<vmem>>, vector<2x8xf32>,
    return
  }
  func.func @transform_0(%arg0: i32) -> (i32, i32, i32) {
    %c0_i32 = arith.constant 0 : i32
    %c0_i32_0 = arith.constant 0 : i32
    %c0_i32_1 = arith.constant 0 : i32
    return %arg0, %c0_i32, %c0_i32_0 : i32, i32, i32
  }
  func.func @transform_1(%arg0: i32) -> (i32, i32) {
    %c0_i32 = arith.constant 0 : i32
    %c0_i32_0 = arith.constant 0 : i32
    return %arg0, %c0_i32 : i32, i32
  }
}

</mosaic_0001>

<llo_original>
// kernel: tpu_custom_call.1
$region0: #{tpu_custom_call.1}
  #allocation0 [shape = 'u32[]', space=smem, size = 0x4, offset = 0x4, fixed_abs, tag = 'smem constant byte address 0x4 - core index']
  #allocation1 [shape = 'u32[72,128]{1,0:T(1,128)}', space=vmem, size = 0x9000, scoped, tag = 'internal scratch']
  %s0 = inlined_call_operand.hbm [shape: f32[2,8,32], index: 0, kind: input, shape index: {}]
  %s1 = inlined_call_operand.hbm [shape: f32[2,8], index: 1, kind: output, shape index: {}]
  %s2 = sld [smem:[#allocation0]]
  $region18: #{tpu_custom_call.1} parent=0
    _
  %s4 = ssub.s32 1, %s2
  %s5 = scalar_select 0, %s4, %s2
  $region1: #{tpu_custom_call.1} parent=0
    #allocation2 [shape = 'u8[8192]{0}', space=vmem, size = 0x2000, scoped, tag = 'input window, operand 0, single buffered']
    #allocation3 [shape = 's32[1]{0}', space=sflag, size = 0x4, scoped, tag = 'scoped memory for tpu_custom_call.1']
    #allocation4 [shape = 's32[1]{0}', space=sflag, size = 0x4, scoped, tag = 'scoped memory for tpu_custom_call.1']
    #allocation5 [shape = 'u8[1024]{0}', space=vmem, size = 0x400, scoped, tag = 'output window, operand 0, single buffered']
    %6 = vsyncpa [#allocation3], 0
    %7 = vsyncpa [#allocation4], 0
    // Predicated region
    $region2: #{tpu_custom_call.1} parent=1 // pred_check
      _
    $region3: #{tpu_custom_call.1} parent=1 // pred_check_branch
      %9 = sbr.rel (0) target = $region5
    $region4: #{tpu_custom_call.1} parent=1 // pred_region
      %11 = vsyncadd [#allocation3], 0
      %s12 = sshll.u32 %s0, 4
      %s13 = int_to_ptr.hbm [resolvable:$true] %s12
      %s14 = sshll.u32 [#allocation2], 4
      %s15 = int_to_ptr.vmem [resolvable:$true] %s14
      %20 = dma.hbm_to_vmem [thread:$0]  %s13, 256, %s15, [#allocation3], 128, 128, 8
    $region5: #{tpu_custom_call.1} parent=1 // pred_fallthru
      _
    // Predicated region
    $region6: #{tpu_custom_call.1} parent=1 // pred_check
      _
    $region7: #{tpu_custom_call.1} parent=1 // pred_check_branch
      %22 = sbr.rel (0) target = $region9
    $region8: #{tpu_custom_call.1} parent=1 // pred_region
      %24 = dma.done [#allocation3], 256
    $region9: #{tpu_custom_call.1} parent=1 // pred_fallthru
      _
    %v25 = vld [vmem:[#allocation2] sm:$0xff]
    %v26 = vld [vmem:[#allocation2 + $0x8] sm:$0xff]
    %v27 = vmul.f32 %v25, %v25
    %v28 = vmul.f32 %v26, %v26
    %vm29 = vcmask 261120
    %v30 = vsel %vm29, %v27, 0.0
    %31 = vadd.xlane.f32.xlu0 %v30
    %v32 = vpop.xlane.xlu0 %31
    %v33 = vsel %vm29, %v28, 0.0
    %34 = vadd.xlane.f32.xlu0 %v33
    %v35 = vpop.xlane.xlu0 %34
    %v36 = vrsqrt.pop %v32
    %v37 = vmul.f32 %v36, %v32
    %v38 = vmul.f32 %v37, %v36
    %v39 = vmul.f32 0.5, %v38
    %v40 = vsub.f32 1.5, %v39
    %v41 = vmul.f32 %v36, %v40
    %vm42 = vweird.f32 %v32
    %vm43 = vweird.f32 %v36
    %vm44 = vmor %vm42, %vm43
    %v45 = vsel %vm44, %v36, %v41
    %v46 = vrsqrt.pop %v35
    %v47 = vmul.f32 %v46, %v35
    %v48 = vmul.f32 %v47, %v46
    %v49 = vmul.f32 0.5, %v48
    %v50 = vsub.f32 1.5, %v49
    %v51 = vmul.f32 %v46, %v50
    %vm52 = vweird.f32 %v35
    %vm53 = vweird.f32 %v46
    %vm54 = vmor %vm52, %vm53
    %v55 = vsel %vm54, %v46, %v51
    %v56 = vmul.f32 %v25, %v45
    %v57 = vmul.f32 %v26, %v55
    %v58 = vsel %vm29, %v56, 0.0
    %v59 = vrot.slane %v58, 4
    %v60 = vadd.f32 %v58, %v59
    %v61 = vrot.slane %v60, 2
    %v62 = vadd.f32 %v60, %v61
    %v63 = vrot.slane %v62, 1
    %v64 = vadd.f32 %v62, %v63
    %v65 = vsel %vm29, %v57, 0.0
    %v66 = vrot.slane %v65, 4
    %v67 = vadd.f32 %v65, %v66
    %v68 = vrot.slane %v67, 2
    %v69 = vadd.f32 %v67, %v68
    %v70 = vrot.slane %v69, 1
    %v71 = vadd.f32 %v69, %v70
    %v72 = vmul.f32 %v25, %v64
    %v73 = vmul.f32 %v26, %v71
    %v74 = vsel %vm29, %v72, 0.0
    %75 = vadd.xlane.f32.xlu0 %v74
    %v76 = vpop.xlane.xlu0 %75
    %v77 = vsel %vm29, %v73, 0.0
    %78 = vadd.xlane.f32.xlu0 %v77
    %v79 = vpop.xlane.xlu0 %78
    %v80 = vmul.f32 %v76, %v45
    %v81 = vmul.f32 %v79, %v55
    %v82 = vsub.f32 %v80, 1.0
    %v83 = vsub.f32 %v81, 1.0
    %v84 = vmul.f32 %v82, 0.14285715
    %v85 = vmul.f32 %v83, 0.14285715
    %v88 = vlaneseq
    %v89 = vand.u32 %v88, 127
    %v90 = vperm.slane %v84, %v89
    %v91 = vperm.slane %v85, %v89
    %vm92 = vcmask 1041409
    %v93 = vsel %vm92, %v91, %v90
    %vm95 = vcmask 58368
    %96 = vst.msk [vmem:[#allocation5] sm:$0x3] %vm95, %v93
    // Predicated region
    $region10: #{tpu_custom_call.1} parent=1 // pred_check
      _
    $region11: #{tpu_custom_call.1} parent=1 // pred_check_branch
      %98 = sbr.rel (0) target = $region13
    $region12: #{tpu_custom_call.1} parent=1 // pred_region
      %100 = vsyncadd [#allocation4], 0
      %s102 = sshll.u32 [#allocation5], 4
      %s103 = int_to_ptr.vmem [resolvable:$true] %s102
      %s104 = sshll.u32 %s1, 4
      %s105 = int_to_ptr.hbm [resolvable:$true] %s104
      %107 = dma.vmem_to_hbm [thread:$0]  %s103, 32, %s105, [#allocation4]
    $region13: #{tpu_custom_call.1} parent=1 // pred_fallthru
      _
    // Predicated region
    $region14: #{tpu_custom_call.1} parent=1 // pred_check
      _
    $region15: #{tpu_custom_call.1} parent=1 // pred_check_branch
      %109 = sbr.rel (0) target = $region17
    $region16: #{tpu_custom_call.1} parent=1 // pred_region
      %111 = dma.done [#allocation4], 32
    $region17: #{tpu_custom_call.1} parent=1 // pred_fallthru
      _
    %112 = vsyncpa [#allocation3], 1
    %113 = vsyncpa [#allocation4], 1

</llo_original>
